<compile_context>
chip_gen: v5e
topology: v5e:2x2
jax: 0.10.0
libtpu: 0.0.40
codegen_flags: <defaults>
</compile_context>

<pallas_src>
import functools

import numpy as np
import jax
import jax.numpy as jnp
from jax.experimental import pallas as pl
from jax.experimental.pallas import tpu as pltpu


# --------------------------- filter construction ---------------------------
def _gaussian_kernel1d(window_size: int, sigma: float) -> np.ndarray:
    # Matches kornia.filters.get_gaussian_kernel1d (normalized to sum 1).
    x = np.arange(window_size, dtype=np.float64) - window_size // 2
    if window_size % 2 == 0:
        x = x + 0.5
    g = np.exp(-(x ** 2) / (2.0 * sigma ** 2))
    return (g / g.sum()).astype(np.float32)


def _reflect_filter_matrix(n: int, taps: np.ndarray) -> np.ndarray:
    """Band matrix M (n, n) with 'reflect' (no edge repeat) boundary folded in.

    (M @ x)[i] == sum_t taps[t] * x[reflect(i - pad + t)], i.e. same-size
    Gaussian filtering along an axis of length n with reflect padding.
    """
    K = len(taps)
    pad = K // 2
    assert n > pad, "reflect padding requires spatial dim > window_size // 2"
    M = np.zeros((n, n), dtype=np.float64)
    for i in range(n):
        for t in range(K):
            src = i - pad + t
            if src < 0:
                src = -src
            elif src >= n:
                src = 2 * (n - 1) - src
            M[i, src] += float(taps[t])
    return M.astype(np.float32)


# ------------------------------- Pallas kernel ------------------------------
def _ssim_kernel(x1_ref, x2_ref, fwt_ref, fht_ref, out_ref, *,
                 Tb, H, Wp, max_val, eps, matmul_dtype):
    """One grid step: SSIM-loss per-lane partial sums over Tb packed images.

    Both separable-filter passes are single MXU matmuls over the stacked
    5-map block; reflect boundary handling lives in the fwt / fht band
    matrices (kept VMEM-resident across steps).
    """
    x1 = x1_ref[...].astype(jnp.float32)     # (Tb, H, Wp)
    x2 = x2_ref[...].astype(jnp.float32)

    # Stack the 5 pre-filter maps on the leading (major) axis -> one matmul
    # per filter pass instead of five (filter weights pushed once, 5x M).
    stack = jnp.concatenate([x1, x2, x1 * x1, x2 * x2, x1 * x2], axis=0)

    md = matmul_dtype
    fwt = fwt_ref[...].astype(md)            # (Wp, Wp) = blockdiag(Fw).T
    fht = fht_ref[...].astype(md)            # (H,  H)  = Fh.T

    # ---- W (lane) pass: one 2-D MXU matmul over all 5*Tb images.
    # The (5Tb,H,Wp)<->(5Tb*H,Wp) reshapes are free views when H % 8 == 0.
    # TODO(synk): pad H / Wp to multiples of 8 (with a loss mask) to guarantee
    # relayout-free reshapes for arbitrary image sizes.
    s2 = stack.reshape(5 * Tb * H, Wp).astype(md)
    h2 = jnp.dot(s2, fwt, preferred_element_type=jnp.float32)    # (5Tb*H, Wp)

    # ---- H pass: one XLU transpose of the stacked block, then a single
    # lane matmul (M = 5*Tb*Wp, weights = Fh^T pushed once).
    ht = jnp.swapaxes(h2.reshape(5 * Tb, H, Wp), 1, 2)           # (5Tb, Wp, H)
    f2 = jnp.dot(ht.reshape(5 * Tb * Wp, H).astype(md), fht,
                 preferred_element_type=jnp.float32)             # (5Tb*Wp, H)
    # TODO(synk): when H < 128, lane-pack the H axis too (block-diagonal fht)
    # so this matmul and the epilogue below are fully lane-dense.

    n = Tb * Wp
    mu1 = f2[0 * n:1 * n]
    mu2 = f2[1 * n:2 * n]
    e11 = f2[2 * n:3 * n]
    e22 = f2[3 * n:4 * n]
    e12 = f2[4 * n:5 * n]

    C1 = (0.01 * max_val) ** 2
    C2 = (0.03 * max_val) ** 2
    # Fold each filtered map into num/den as soon as possible (small live set).
    mu1_mu2 = mu1 * mu2
    num_cs = 2.0 * (e12 - mu1_mu2) + C2          # 2*sigma12 + C2
    mu1_sq = mu1 * mu1
    mu2_sq = mu2 * mu2
    den_cs = (e11 - mu1_sq) + (e22 - mu2_sq) + C2  # sigma1_sq + sigma2_sq + C2
    num = (2.0 * mu1_mu2 + C1) * num_cs
    den = (mu1_sq + mu2_sq + C1) * den_cs
    loss_map = 1.0 - num / (den + eps)           # (Tb*Wp, H)

    # Per-step, per-lane partial sums (sublane/VPU reduce only); the wrapper
    # finishes the cross-lane + cross-block reduction.
    out_ref[...] = jnp.sum(loss_map, axis=0, keepdims=True).reshape(1, 1, H)


# --------------------------- sizing / VMEM budget ---------------------------
def _vmem_phys_bytes():
    try:
        info = pltpu.get_tpu_info()
        v = int(getattr(info, "vmem_capacity_bytes", 0) or 0)
        if v > 0:
            return v
    except Exception:
        pass
    return 64 * 1024 * 1024          # conservative default: v7x per-TC VMEM


def _vmem_budget_bytes():
    phys = _vmem_phys_bytes()
    # ~48 MiB on v7x (64 MiB physical), 64 MiB on v5e/v6e (128 MiB physical).
    return min(64 * 1024 * 1024, (phys * 3) // 4)


def _vmem_limit_bytes():
    phys = _vmem_phys_bytes()
    return min((phys * 7) // 8, _vmem_budget_bytes() + 16 * 1024 * 1024)


def _pack_factor(N, W, lane=128):
    """Largest divisor of N with L*W <= 128 (lane packing factor)."""
    if W >= lane:
        return 1
    cap = max(1, lane // W)
    L = 1
    for d in range(1, cap + 1):
        if N % d == 0:
            L = d
    return L


def _pick_block_images(Np, H, Wp, in_itemsize, max_block_images=None):
    """Largest divisor of Np within the per-generation VMEM budget; prefers
    at least 2 grid steps (v7x megacore sharding + pipelining)."""
    pad_h = ((H + 7) // 8) * 8
    pad_w = ((Wp + 127) // 128) * 128
    img_f32 = pad_h * pad_w * 4
    img_in = pad_h * pad_w * in_itemsize
    # Double-buffered inputs (2 tensors x 2 buffers) + ~16 live block-sized
    # f32 temps (5-map stack, two filter passes, transposed copy, epilogue).
    per_img = 4 * img_in + 16 * img_f32
    h_lane = ((H + 127) // 128) * 128
    filt = 2 * 4 * (pad_w * pad_w + pad_h * h_lane)   # double-buffered filters
    budget = _vmem_budget_bytes()
    cap = max(1, (budget - filt) // per_img)
    if max_block_images is not None:
        cap = min(cap, int(max_block_images))
    if Np >= 2:
        cap = min(cap, Np // 2)       # guarantee >= 2 grid steps when possible
    cap = max(1, min(cap, Np))
    tb = 1
    for d in range(1, cap + 1):
        if Np % d == 0:
            tb = d
    return tb


# --------------------------------- wrapper ----------------------------------
def ssim_loss_pallas(image_pred, image_gt, *, window_size=11, window_sigma=1.5,
                     max_val=1.0, eps=1e-12, reduction="mean", loss_weight=1.0,
                     max_block_images=None, filter_matmul_dtype=None):
    """Forward of SSIMLoss (weight=None). Returns a scalar for 'mean'/'sum'."""
    assert reduction in ("mean", "sum")
    # TODO(synk): reduction='none' (per-pixel loss map output) and elementwise
    # `weight` / `avg_factor` support are not wired into the kernel.
    B, C, H, W = image_pred.shape
    pad = window_size // 2
    assert H > pad and W > pad, "reflect padding needs H, W > window_size // 2"
    N = B * C

    # Keep original dtype for the HBM->VMEM DMA; cast to f32 inside the kernel.
    x1 = image_pred.reshape(N, H, W)
    x2 = image_gt.reshape(N, H, W)

    # Lane packing: L images side-by-side along the lane (W) axis when W<128.
    L = _pack_factor(N, W)
    Np, Wp = N // L, L * W
    if L > 1:
        def pack(x):
            x = x.reshape(Np, L, H, W)
            x = jnp.transpose(x, (0, 2, 1, 3))        # (Np, H, L, W)
            return x.reshape(Np, H, Wp)
        x1, x2 = pack(x1), pack(x2)

    g = _gaussian_kernel1d(window_size, window_sigma)
    fw = _reflect_filter_matrix(W, g)                 # (W, W)
    fh = _reflect_filter_matrix(H, g)                 # (H, H)
    # Block-diagonal lane filter (L independent packed images), transposed for
    # right-multiplication; fh likewise transposed (VMEM-resident in-kernel).
    # TODO(synk): spatially tile the band-filter matmuls (strip + K-1 halo) for
    # very large H/W — dense (H,H)/(Wp,Wp) filters do O(H)+O(W) MXU work per
    # pixel and their VMEM footprint grows quadratically.
    fwt = jnp.asarray(np.kron(np.eye(L, dtype=np.float32), fw.T))  # (Wp, Wp)
    fht = jnp.asarray(np.ascontiguousarray(fh.T))                  # (H, H)

    in_itemsize = jnp.dtype(x1.dtype).itemsize
    Tb = _pick_block_images(Np, H, Wp, in_itemsize, max_block_images)
    nblocks = Np // Tb

    matmul_dtype = jnp.float32 if filter_matmul_dtype is None else filter_matmul_dtype

    kernel = functools.partial(_ssim_kernel, Tb=Tb, H=H, Wp=Wp,
                               max_val=float(max_val), eps=float(eps),
                               matmul_dtype=matmul_dtype)

    flops_filter = 5 * Np * (2 * H * Wp * Wp + 2 * Wp * H * H)
    cost = pl.CostEstimate(
        flops=int(flops_filter + 30 * Np * H * Wp),
        transcendentals=0,
        bytes_accessed=int(2 * Np * H * Wp * in_itemsize
                           + (Wp * Wp + H * H) * 4 + nblocks * H * 4))

    partials = pl.pallas_call(
        kernel,
        out_shape=jax.ShapeDtypeStruct((nblocks, 1, H), jnp.float32),
        grid=(nblocks,),
        in_specs=[
            pl.BlockSpec((Tb, H, Wp), lambda i: (i, 0, 0)),
            pl.BlockSpec((Tb, H, Wp), lambda i: (i, 0, 0)),
            pl.BlockSpec((Wp, Wp), lambda i: (0, 0)),     # VMEM-resident filter
            pl.BlockSpec((H, H), lambda i: (0, 0)),       # VMEM-resident filter
        ],
        out_specs=pl.BlockSpec((1, 1, H), lambda i: (i, 0, 0)),
        compiler_params=pltpu.CompilerParams(
            dimension_semantics=("parallel",),            # no cross-step state
            vmem_limit_bytes=_vmem_limit_bytes()),
        cost_estimate=cost,
    )(x1, x2, fwt, fht)

    total = jnp.sum(partials)
    if reduction == "mean":
        loss = total / jnp.float32(N * H * W)
    else:  # 'sum'
        loss = total
    return jnp.float32(loss_weight) * loss


# ---------------- pure-JAX reference (for correctness check) ----------------
def _ssim_loss_ref(pred, target, window_size=11, window_sigma=1.5,
                   max_val=1.0, eps=1e-12, loss_weight=1.0):
    B, C, H, W = pred.shape
    pad = window_size // 2
    g = _gaussian_kernel1d(window_size, window_sigma)
    k2d = jnp.asarray(np.outer(g, g), jnp.float32).reshape(
        1, 1, window_size, window_size)

    def filt(x):
        xp = jnp.pad(x, ((0, 0), (0, 0), (pad, pad), (pad, pad)), mode="reflect")
        xp = xp.reshape(B * C, 1, H + 2 * pad, W + 2 * pad)
        y = jax.lax.conv_general_dilated(
            xp, k2d, (1, 1), "VALID",
            dimension_numbers=("NCHW", "OIHW", "NCHW"),
            precision=jax.lax.Precision.HIGHEST)
        return y.reshape(B, C, H, W)

    C1 = (0.01 * max_val) ** 2
    C2 = (0.03 * max_val) ** 2
    p = pred.astype(jnp.float32)
    t = target.astype(jnp.float32)
    mu1, mu2 = filt(p), filt(t)
    mu1_sq, mu2_sq, mu1_mu2 = mu1 * mu1, mu2 * mu2, mu1 * mu2
    s1 = filt(p * p) - mu1_sq
    s2 = filt(t * t) - mu2_sq
    s12 = filt(p * t) - mu1_mu2
    num = (2.0 * mu1_mu2 + C1) * (2.0 * s12 + C2)
    den = (mu1_sq + mu2_sq + C1) * (s1 + s2 + C2)
    ssim = num / (den + eps)
    return loss_weight * jnp.mean(1.0 - ssim)


if __name__ == "__main__":
    key = jax.random.PRNGKey(0)
    k1, k2, k3, k4, k5, k6 = jax.random.split(key, 6)

    # Spec-sized test: (B, C, H, W) = (2, 4, 16, 16); the 8 images lane-pack
    # into a single (1, 16, 128) block (fully lane-dense W pass / epilogue).
    B, C, H, W = 2, 4, 16, 16
    pred = jax.random.uniform(k1, (B, C, H, W), dtype=jnp.float32)
    gt = jax.random.uniform(k2, (B, C, H, W), dtype=jnp.float32)
    loss = jax.block_until_ready(ssim_loss_pallas(pred, gt))
    ref = jax.block_until_ready(_ssim_loss_ref(pred, gt))
    np.testing.assert_allclose(np.asarray(loss), np.asarray(ref),
                               rtol=1e-3, atol=1e-4)

    # Multi-block test: 24 images -> 3 lane-packed blocks -> parallel grid of 3.
    pred2 = jax.random.uniform(k3, (3, 8, H, W), dtype=jnp.float32)
    gt2 = jax.random.uniform(k4, (3, 8, H, W), dtype=jnp.float32)
    loss2 = jax.block_until_ready(ssim_loss_pallas(pred2, gt2))
    ref2 = jax.block_until_ready(_ssim_loss_ref(pred2, gt2))
    np.testing.assert_allclose(np.asarray(loss2), np.asarray(ref2),
                               rtol=1e-3, atol=1e-4)

    # No-packing path (W >= 128), 2 grid steps, 'sum' reduction + loss_weight.
    pred3 = jax.random.uniform(k5, (1, 2, 16, 128), dtype=jnp.float32)
    gt3 = jax.random.uniform(k6, (1, 2, 16, 128), dtype=jnp.float32)
    loss3 = jax.block_until_ready(
        ssim_loss_pallas(pred3, gt3, reduction="sum", loss_weight=0.5))
    ref3 = jax.block_until_ready(
        0.5 * _ssim_loss_ref(pred3, gt3) * (1 * 2 * 16 * 128))
    np.testing.assert_allclose(np.asarray(loss3), np.asarray(ref3),
                               rtol=1e-3, atol=1e-2)

    print("KERNEL_OK")
</pallas_src>

<mosaic_0001>
module attributes {stable_mosaic.version = 11 : i64} {
  func.func @_ssim_kernel(%arg0: i32, %arg1: memref<1x16x128xf32, #tpu.memory_space<vmem>>, %arg2: memref<1x16x128xf32, #tpu.memory_space<vmem>>, %arg3: memref<128x128xf32, #tpu.memory_space<vmem>>, %arg4: memref<16x16xf32, #tpu.memory_space<vmem>>, %arg5: memref<1x1x16xf32, #tpu.memory_space<vmem>>) attributes {dimension_semantics = [#tpu.dimension_semantics<parallel>], iteration_bounds = array<i64: 1>, scalar_prefetch = 0 : i64, scratch_operands = 0 : i64, tpu.core_type = #tpu.core_type<tc>, window_params = [{transform_indices = @transform_0, window_bounds = array<i64: 1, 16, 128>}, {transform_indices = @transform_1, window_bounds = array<i64: 1, 16, 128>}, {pipeline_mode = #tpu.pipeline_mode<synchronous>, transform_indices = @transform_2, window_bounds = array<i64: 128, 128>}, {pipeline_mode = #tpu.pipeline_mode<synchronous>, transform_indices = @transform_3, window_bounds = array<i64: 16, 16>}, {transform_indices = @transform_4, window_bounds = array<i64: 1, 1, 16>}]} {
    %c0 = arith.constant 0 : index
    %c0_0 = arith.constant 0 : index
    %c0_1 = arith.constant 0 : index
    %0 = vector.load %arg1[%c0, %c0_0, %c0_1] : memref<1x16x128xf32, #tpu.memory_space<vmem>>, vector<1x16x128xf32>
    %c0_2 = arith.constant 0 : index
    %c0_3 = arith.constant 0 : index
    %c0_4 = arith.constant 0 : index
    %1 = vector.load %arg2[%c0_2, %c0_3, %c0_4] : memref<1x16x128xf32, #tpu.memory_space<vmem>>, vector<1x16x128xf32>
    %2 = arith.mulf %0, %0 : vector<1x16x128xf32>
    %3 = arith.mulf %1, %1 : vector<1x16x128xf32>
    %4 = arith.mulf %0, %1 : vector<1x16x128xf32>
    %5 = tpu.concatenate %0, %1, %2, %3, %4 in 0 : vector<1x16x128xf32>, vector<1x16x128xf32>, vector<1x16x128xf32>, vector<1x16x128xf32>, vector<1x16x128xf32> -> vector<5x16x128xf32>
    %c0_5 = arith.constant 0 : index
    %c0_6 = arith.constant 0 : index
    %6 = vector.load %arg3[%c0_5, %c0_6] : memref<128x128xf32, #tpu.memory_space<vmem>>, vector<128x128xf32>
    %c0_7 = arith.constant 0 : index
    %c0_8 = arith.constant 0 : index
    %7 = vector.load %arg4[%c0_7, %c0_8] : memref<16x16xf32, #tpu.memory_space<vmem>>, vector<16x16xf32>
    %8 = vector.shape_cast %5 : vector<5x16x128xf32> to vector<80x128xf32>
    %cst = arith.constant dense<0.000000e+00> : vector<80x128xf32>
    %9 = tpu.matmul %8, %6, %cst {dimension_numbers = #tpu.dot_dimension_numbers<[1], [0], [0], [1], [0, 0, 1, 1], [], []>} : vector<80x128xf32>, vector<128x128xf32>, vector<80x128xf32> -> vector<80x128xf32>
    %10 = vector.shape_cast %9 : vector<80x128xf32> to vector<5x16x128xf32>
    %11 = tpu.transpose %10, [0, 2, 1] : vector<5x16x128xf32> -> vector<5x128x16xf32>
    %12 = vector.shape_cast %11 : vector<5x128x16xf32> to vector<640x16xf32>
    %cst_9 = arith.constant dense<0.000000e+00> : vector<640x16xf32>
    %13 = tpu.matmul %12, %7, %cst_9 {dimension_numbers = #tpu.dot_dimension_numbers<[1], [0], [0], [1], [0, 0, 1, 1], [], []>} : vector<640x16xf32>, vector<16x16xf32>, vector<640x16xf32> -> vector<640x16xf32>
    %14 = vector.extract_strided_slice %13 {offsets = [0, 0], sizes = [128, 16], strides = [1, 1]} : vector<640x16xf32> to vector<128x16xf32>
    %15 = vector.extract_strided_slice %13 {offsets = [128, 0], sizes = [128, 16], strides = [1, 1]} : vector<640x16xf32> to vector<128x16xf32>
    %16 = vector.extract_strided_slice %13 {offsets = [256, 0], sizes = [128, 16], strides = [1, 1]} : vector<640x16xf32> to vector<128x16xf32>
    %17 = vector.extract_strided_slice %13 {offsets = [384, 0], sizes = [128, 16], strides = [1, 1]} : vector<640x16xf32> to vector<128x16xf32>
    %18 = vector.extract_strided_slice %13 {offsets = [512, 0], sizes = [128, 16], strides = [1, 1]} : vector<640x16xf32> to vector<128x16xf32>
    %19 = arith.mulf %14, %15 : vector<128x16xf32>
    %20 = arith.subf %18, %19 : vector<128x16xf32>
    %cst_10 = arith.constant 2.000000e+00 : f32
    %21 = vector.broadcast %cst_10 : f32 to vector<128x16xf32>
    %22 = arith.mulf %21, %20 : vector<128x16xf32>
    %cst_11 = arith.constant 8.99999984E-4 : f32
    %23 = vector.broadcast %cst_11 : f32 to vector<128x16xf32>
    %24 = arith.addf %22, %23 : vector<128x16xf32>
    %25 = arith.mulf %14, %14 : vector<128x16xf32>
    %26 = arith.mulf %15, %15 : vector<128x16xf32>
    %27 = arith.subf %16, %25 : vector<128x16xf32>
    %28 = arith.subf %17, %26 : vector<128x16xf32>
    %29 = arith.addf %27, %28 : vector<128x16xf32>
    %cst_12 = arith.constant 8.99999984E-4 : f32
    %30 = vector.broadcast %cst_12 : f32 to vector<128x16xf32>
    %31 = arith.addf %29, %30 : vector<128x16xf32>
    %cst_13 = arith.constant 2.000000e+00 : f32
    %32 = vector.broadcast %cst_13 : f32 to vector<128x16xf32>
    %33 = arith.mulf %32, %19 : vector<128x16xf32>
    %cst_14 = arith.constant 9.99999974E-5 : f32
    %34 = vector.broadcast %cst_14 : f32 to vector<128x16xf32>
    %35 = arith.addf %33, %34 : vector<128x16xf32>
    %36 = arith.mulf %35, %24 : vector<128x16xf32>
    %37 = arith.addf %25, %26 : vector<128x16xf32>
    %cst_15 = arith.constant 9.99999974E-5 : f32
    %38 = vector.broadcast %cst_15 : f32 to vector<128x16xf32>
    %39 = arith.addf %37, %38 : vector<128x16xf32>
    %40 = arith.mulf %39, %31 : vector<128x16xf32>
    %cst_16 = arith.constant 9.99999996E-13 : f32
    %41 = vector.broadcast %cst_16 : f32 to vector<128x16xf32>
    %42 = arith.addf %40, %41 : vector<128x16xf32>
    %43 = arith.divf %36, %42 : vector<128x16xf32>
    %cst_17 = arith.constant 1.000000e+00 : f32
    %44 = vector.broadcast %cst_17 : f32 to vector<128x16xf32>
    %45 = arith.subf %44, %43 : vector<128x16xf32>
    %cst_18 = arith.constant dense<0.000000e+00> : vector<16xf32>
    %46 = vector.multi_reduction <add>, %45, %cst_18 [0] : vector<128x16xf32> to vector<16xf32>
    %47 = vector.shape_cast %46 : vector<16xf32> to vector<1x16xf32>
    %48 = vector.shape_cast %47 : vector<1x16xf32> to vector<1x1x16xf32>
    %c0_19 = arith.constant 0 : index
    %c0_20 = arith.constant 0 : index
    %c0_21 = arith.constant 0 : index
    %49 = vector.load %arg5[%c0_19, %c0_20, %c0_21] : memref<1x1x16xf32, #tpu.memory_space<vmem>>, vector<1x1x16xf32>
    tpu.vector_store %arg5[%c0_19, %c0_20, %c0_21], %48 {strides = array<i32>} : memref<1x1x16xf32, #tpu.memory_space<vmem>>, vector<1x1x16xf32>,
    return
  }
  func.func @transform_0(%arg0: i32) -> (i32, i32, i32) {
    %c0_i32 = arith.constant 0 : i32
    %c0_i32_0 = arith.constant 0 : i32
    %c0_i32_1 = arith.constant 0 : i32
    return %arg0, %c0_i32, %c0_i32_0 : i32, i32, i32
  }
  func.func @transform_1(%arg0: i32) -> (i32, i32, i32) {
    %c0_i32 = arith.constant 0 : i32
    %c0_i32_0 = arith.constant 0 : i32
    %c0_i32_1 = arith.constant 0 : i32
    return %arg0, %c0_i32, %c0_i32_0 : i32, i32, i32
  }
  func.func @transform_2(%arg0: i32) -> (i32, i32) {
    %c0_i32 = arith.constant 0 : i32
    %c0_i32_0 = arith.constant 0 : i32
    %c0_i32_1 = arith.constant 0 : i32
    return %c0_i32, %c0_i32_0 : i32, i32
  }
  func.func @transform_3(%arg0: i32) -> (i32, i32) {
    %c0_i32 = arith.constant 0 : i32
    %c0_i32_0 = arith.constant 0 : i32
    %c0_i32_1 = arith.constant 0 : i32
    return %c0_i32, %c0_i32_0 : i32, i32
  }
  func.func @transform_4(%arg0: i32) -> (i32, i32, i32) {
    %c0_i32 = arith.constant 0 : i32
    %c0_i32_0 = arith.constant 0 : i32
    %c0_i32_1 = arith.constant 0 : i32
    return %arg0, %c0_i32, %c0_i32_0 : i32, i32, i32
  }
}

</mosaic_0001>

<llo_original>
// kernel: tpu_custom_call.1
$region0: #{tpu_custom_call.1}
  #allocation0 [shape = 'u32[]', space=smem, size = 0x4, offset = 0x4, fixed_abs, tag = 'smem constant byte address 0x4 - core index']
  #allocation1 [shape = 'u32[72,128]{1,0:T(1,128)}', space=vmem, size = 0x9000, scoped, tag = 'internal scratch']
  %s0 = inlined_call_operand.hbm [shape: f32[1,16,128], index: 0, kind: input, shape index: {}]
  %s1 = inlined_call_operand.hbm [shape: f32[1,16,128], index: 1, kind: input, shape index: {}]
  %s2 = inlined_call_operand.hbm [shape: f32[128,128], index: 2, kind: input, shape index: {}]
  %s3 = inlined_call_operand.hbm [shape: f32[16,16], index: 3, kind: input, shape index: {}]
  %s4 = inlined_call_operand.hbm [shape: f32[1,1,16], index: 4, kind: output, shape index: {}]
  %s5 = sld [smem:[#allocation0]]
  $region42: #{tpu_custom_call.1} parent=0
    _
  %s7 = ssub.s32 1, %s5
  %s8 = scalar_select 0, %s7, %s5
  $region1: #{tpu_custom_call.1} parent=0
    #allocation2 [shape = 'u8[8192]{0}', space=vmem, size = 0x2000, scoped, tag = 'input window, operand 0, single buffered']
    #allocation3 [shape = 's32[1]{0}', space=sflag, size = 0x4, scoped, tag = 'scoped memory for tpu_custom_call.1']
    #allocation4 [shape = 's32[1]{0}', space=sflag, size = 0x4, scoped, tag = 'scoped memory for tpu_custom_call.1']
    #allocation5 [shape = 'u8[8192]{0}', space=vmem, size = 0x2000, scoped, tag = 'input window, operand 1, single buffered']
    #allocation6 [shape = 's32[1]{0}', space=sflag, size = 0x4, scoped, tag = 'scoped memory for tpu_custom_call.1']
    #allocation7 [shape = 'u8[65536]{0}', space=vmem, size = 0x10000, scoped, tag = 'input window, operand 2, single buffered']
    #allocation8 [shape = 'u8[8192]{0}', space=vmem, size = 0x2000, scoped, tag = 'input window, operand 3, single buffered']
    #allocation9 [shape = 's32[1]{0}', space=sflag, size = 0x4, scoped, tag = 'scoped memory for tpu_custom_call.1']
    #allocation10 [shape = 'u8[512]{0}', space=vmem, size = 0x400, scoped, tag = 'output window, operand 0, single buffered']
    %9 = vsyncpa [#allocation3], 0
    %10 = vsyncpa [#allocation6], 0
    %11 = vsyncpa [#allocation9], 0
    %12 = vsyncpa [#allocation4], 0
    // Predicated region
    $region2: #{tpu_custom_call.1} parent=1 // pred_check
      _
    $region3: #{tpu_custom_call.1} parent=1 // pred_check_branch
      %14 = sbr.rel (0) target = $region5
    $region4: #{tpu_custom_call.1} parent=1 // pred_region
      %16 = vsyncadd [#allocation3], 0
      %s17 = sshll.u32 %s0, 4
      %s18 = int_to_ptr.hbm [resolvable:$true] %s17
      %s19 = sshll.u32 [#allocation2], 4
      %s20 = int_to_ptr.vmem [resolvable:$true] %s19
      %25 = dma.hbm_to_vmem [thread:$0]  %s18, 256, %s20, [#allocation3], 128, 128, 8
    $region5: #{tpu_custom_call.1} parent=1 // pred_fallthru
      _
    // Predicated region
    $region6: #{tpu_custom_call.1} parent=1 // pred_check
      _
    $region7: #{tpu_custom_call.1} parent=1 // pred_check_branch
      %27 = sbr.rel (0) target = $region9
    $region8: #{tpu_custom_call.1} parent=1 // pred_region
      %29 = vsyncadd [#allocation6], 0
      %s30 = sshll.u32 %s1, 4
      %s31 = int_to_ptr.hbm [resolvable:$true] %s30
      %s32 = sshll.u32 [#allocation5], 4
      %s33 = int_to_ptr.vmem [resolvable:$true] %s32
      %38 = dma.hbm_to_vmem [thread:$0]  %s31, 256, %s33, [#allocation6], 128, 128, 8
    $region9: #{tpu_custom_call.1} parent=1 // pred_fallthru
      _
    // Predicated region
    $region10: #{tpu_custom_call.1} parent=1 // pred_check
      _
    $region11: #{tpu_custom_call.1} parent=1 // pred_check_branch
      %40 = sbr.rel (0) target = $region13
    $region12: #{tpu_custom_call.1} parent=1 // pred_region
      %42 = vsyncadd [#allocation6], 0
      %s43 = sshll.u32 %s2, 4
      %s44 = int_to_ptr.hbm [resolvable:$true] %s43
      %s45 = sshll.u32 [#allocation7], 4
      %s46 = int_to_ptr.vmem [resolvable:$true] %s45
      %51 = dma.hbm_to_vmem [thread:$0]  %s44, 2048, %s46, [#allocation6], 128, 128, 8
    $region13: #{tpu_custom_call.1} parent=1 // pred_fallthru
      _
    // Predicated region
    $region14: #{tpu_custom_call.1} parent=1 // pred_check
      _
    $region15: #{tpu_custom_call.1} parent=1 // pred_check_branch
      %53 = sbr.rel (0) target = $region17
    $region16: #{tpu_custom_call.1} parent=1 // pred_region
      %55 = vsyncadd [#allocation9], 0
      %s56 = sshll.u32 %s3, 4
      %s57 = int_to_ptr.hbm [resolvable:$true] %s56
      %s58 = sshll.u32 [#allocation8], 4
      %s59 = int_to_ptr.vmem [resolvable:$true] %s58
      %64 = dma.hbm_to_vmem [thread:$0]  %s57, 256, %s59, [#allocation9], 128, 128, 8
    $region17: #{tpu_custom_call.1} parent=1 // pred_fallthru
      _
    // Predicated region
    $region18: #{tpu_custom_call.1} parent=1 // pred_check
      _
    $region19: #{tpu_custom_call.1} parent=1 // pred_check_branch
      %66 = sbr.rel (0) target = $region21
    $region20: #{tpu_custom_call.1} parent=1 // pred_region
      %68 = dma.done [#allocation3], 256
    $region21: #{tpu_custom_call.1} parent=1 // pred_fallthru
      _
    // Predicated region
    $region22: #{tpu_custom_call.1} parent=1 // pred_check
      _
    $region23: #{tpu_custom_call.1} parent=1 // pred_check_branch
      %70 = sbr.rel (0) target = $region25
    $region24: #{tpu_custom_call.1} parent=1 // pred_region
      %72 = dma.done [#allocation6], 256
    $region25: #{tpu_custom_call.1} parent=1 // pred_fallthru
      _
    // Predicated region
    $region26: #{tpu_custom_call.1} parent=1 // pred_check
      _
    $region27: #{tpu_custom_call.1} parent=1 // pred_check_branch
      %74 = sbr.rel (0) target = $region29
    $region28: #{tpu_custom_call.1} parent=1 // pred_region
      %76 = dma.done [#allocation6], 2048
    $region29: #{tpu_custom_call.1} parent=1 // pred_fallthru
      _
    // Predicated region
    $region30: #{tpu_custom_call.1} parent=1 // pred_check
      _
    $region31: #{tpu_custom_call.1} parent=1 // pred_check_branch
      %78 = sbr.rel (0) target = $region33
    $region32: #{tpu_custom_call.1} parent=1 // pred_region
      %80 = dma.done [#allocation9], 256
    $region33: #{tpu_custom_call.1} parent=1 // pred_fallthru
      _
    %v81 = vld [vmem:[#allocation2] sm:$0xff]
    %v82 = vld [vmem:[#allocation2 + $0x8] sm:$0xff]
    %v83 = vld [vmem:[#allocation5] sm:$0xff]
    %v84 = vld [vmem:[#allocation5 + $0x8] sm:$0xff]
    %v85 = vmul.f32 %v81, %v81
    %v86 = vmul.f32 %v82, %v82
    %v87 = vmul.f32 %v83, %v83
    %v88 = vmul.f32 %v84, %v84
    %v89 = vmul.f32 %v81, %v83
    %v90 = vmul.f32 %v82, %v84
    %v91 = vld [vmem:[#allocation7] sm:$0xff]
    %v92 = vld [vmem:[#allocation7 + $0x8] sm:$0xff]
    %v93 = vld [vmem:[#allocation7 + $0x10] sm:$0xff]
    %v94 = vld [vmem:[#allocation7 + $0x18] sm:$0xff]
    %v95 = vld [vmem:[#allocation7 + $0x20] sm:$0xff]
    %v96 = vld [vmem:[#allocation7 + $0x28] sm:$0xff]
    %v97 = vld [vmem:[#allocation7 + $0x30] sm:$0xff]
    %v98 = vld [vmem:[#allocation7 + $0x38] sm:$0xff]
    %v99 = vld [vmem:[#allocation7 + $0x40] sm:$0xff]
    %v100 = vld [vmem:[#allocation7 + $0x48] sm:$0xff]
    %v101 = vld [vmem:[#allocation7 + $0x50] sm:$0xff]
    %v102 = vld [vmem:[#allocation7 + $0x58] sm:$0xff]
    %v103 = vld [vmem:[#allocation7 + $0x60] sm:$0xff]
    %v104 = vld [vmem:[#allocation7 + $0x68] sm:$0xff]
    %v105 = vld [vmem:[#allocation7 + $0x70] sm:$0xff]
    %v106 = vld [vmem:[#allocation7 + $0x78] sm:$0xff]
    %v107 = vld [vmem:[#allocation8] sm:$0xff]
    %v108 = vld [vmem:[#allocation8 + $0x8] sm:$0xff]
    %109 = vmatpush.msra.mxu0 %v106
    %110 = vmatpush.msra.mxu0 %v105
    %111 = vmatpush.msra.mxu0 %v104
    %112 = vmatpush.msra.mxu0 %v103
    %113 = vmatpush.msra.mxu0 %v102
    %114 = vmatpush.msra.mxu0 %v101
    %115 = vmatpush.msra.mxu0 %v100
    %116 = vmatpush.msra.mxu0 %v99
    %117 = vmatpush.msra.mxu0 %v98
    %118 = vmatpush.msra.mxu0 %v97
    %119 = vmatpush.msra.mxu0 %v96
    %120 = vmatpush.msra.mxu0 %v95
    %121 = vmatpush.msra.mxu0 %v94
    %122 = vmatpush.msra.mxu0 %v93
    %123 = vmatpush.msra.mxu0 %v92
    %124 = vmatpush.msra.mxu0 %v91
    %125 = vmatmul.f32.gmra.mxu0 %v81
    %v126 = vpop.f32.mrf.mxu0
    %v127 = vadd.f32 0.0, %v126
    %128 = vmatmul.f32.gmra.mxu0 %v82
    %v129 = vpop.f32.mrf.mxu0
    %v130 = vadd.f32 0.0, %v129
    %131 = vmatmul.f32.gmra.mxu0 %v83
    %v132 = vpop.f32.mrf.mxu0
    %v133 = vadd.f32 0.0, %v132
    %134 = vmatmul.f32.gmra.mxu0 %v84
    %v135 = vpop.f32.mrf.mxu0
    %v136 = vadd.f32 0.0, %v135
    %137 = vmatmul.f32.gmra.mxu0 %v85
    %v138 = vpop.f32.mrf.mxu0
    %v139 = vadd.f32 0.0, %v138
    %140 = vmatmul.f32.gmra.mxu0 %v86
    %v141 = vpop.f32.mrf.mxu0
    %v142 = vadd.f32 0.0, %v141
    %143 = vmatmul.f32.gmra.mxu0 %v87
    %v144 = vpop.f32.mrf.mxu0
    %v145 = vadd.f32 0.0, %v144
    %146 = vmatmul.f32.gmra.mxu0 %v88
    %v147 = vpop.f32.mrf.mxu0
    %v148 = vadd.f32 0.0, %v147
    %149 = vmatmul.f32.gmra.mxu0 %v89
    %v150 = vpop.f32.mrf.mxu0
    %v151 = vadd.f32 0.0, %v150
    %152 = vmatmul.f32.gmra.mxu0 %v90
    %v153 = vpop.f32.mrf.mxu0
    %v154 = vadd.f32 0.0, %v153
    %155 = vdwg.mxu0
    %156 = vxpose.xlu0.b32.start [1/16] %v127, 128
    %157 = vxpose.xlu0.b32.cont [2/16] %v130, 128
    %158 = vxpose.xlu0.b32.cont [3/16] 0.0, 128
    %159 = vxpose.xlu0.b32.cont [4/16] 0.0, 128
    %160 = vxpose.xlu0.b32.cont [5/16] 0.0, 128
    %161 = vxpose.xlu0.b32.cont [6/16] 0.0, 128
    %162 = vxpose.xlu0.b32.cont [7/16] 0.0, 128
    %163 = vxpose.xlu0.b32.cont [8/16] 0.0, 128
    %164 = vxpose.xlu0.b32.cont [9/16] 0.0, 128
    %165 = vxpose.xlu0.b32.cont [10/16] 0.0, 128
    %166 = vxpose.xlu0.b32.cont [11/16] 0.0, 128
    %167 = vxpose.xlu0.b32.cont [12/16] 0.0, 128
    %168 = vxpose.xlu0.b32.cont [13/16] 0.0, 128
    %169 = vxpose.xlu0.b32.cont [14/16] 0.0, 128
    %170 = vxpose.xlu0.b32.cont [15/16] 0.0, 128
    %171 = vxpose.xlu0.b32.end [16/16] 0.0, 128
    %v172 = vpop.trf.xlu0
    %v173 = vpop.trf.xlu0
    %v174 = vpop.trf.xlu0
    %v175 = vpop.trf.xlu0
    %v176 = vpop.trf.xlu0
    %v177 = vpop.trf.xlu0
    %v178 = vpop.trf.xlu0
    %v179 = vpop.trf.xlu0
    %v180 = vpop.trf.xlu0
    %v181 = vpop.trf.xlu0
    %v182 = vpop.trf.xlu0
    %v183 = vpop.trf.xlu0
    %v184 = vpop.trf.xlu0
    %v185 = vpop.trf.xlu0
    %v186 = vpop.trf.xlu0
    %v187 = vpop.trf.xlu0
    %188 = vxpose.xlu0.b32.start [1/16] %v133, 128
    %189 = vxpose.xlu0.b32.cont [2/16] %v136, 128
    %190 = vxpose.xlu0.b32.cont [3/16] 0.0, 128
    %191 = vxpose.xlu0.b32.cont [4/16] 0.0, 128
    %192 = vxpose.xlu0.b32.cont [5/16] 0.0, 128
    %193 = vxpose.xlu0.b32.cont [6/16] 0.0, 128
    %194 = vxpose.xlu0.b32.cont [7/16] 0.0, 128
    %195 = vxpose.xlu0.b32.cont [8/16] 0.0, 128
    %196 = vxpose.xlu0.b32.cont [9/16] 0.0, 128
    %197 = vxpose.xlu0.b32.cont [10/16] 0.0, 128
    %198 = vxpose.xlu0.b32.cont [11/16] 0.0, 128
    %199 = vxpose.xlu0.b32.cont [12/16] 0.0, 128
    %200 = vxpose.xlu0.b32.cont [13/16] 0.0, 128
    %201 = vxpose.xlu0.b32.cont [14/16] 0.0, 128
    %202 = vxpose.xlu0.b32.cont [15/16] 0.0, 128
    %203 = vxpose.xlu0.b32.end [16/16] 0.0, 128
    %v204 = vpop.trf.xlu0
    %v205 = vpop.trf.xlu0
    %v206 = vpop.trf.xlu0
    %v207 = vpop.trf.xlu0
    %v208 = vpop.trf.xlu0
    %v209 = vpop.trf.xlu0
    %v210 = vpop.trf.xlu0
    %v211 = vpop.trf.xlu0
    %v212 = vpop.trf.xlu0
    %v213 = vpop.trf.xlu0
    %v214 = vpop.trf.xlu0
    %v215 = vpop.trf.xlu0
    %v216 = vpop.trf.xlu0
    %v217 = vpop.trf.xlu0
    %v218 = vpop.trf.xlu0
    %v219 = vpop.trf.xlu0
    %220 = vxpose.xlu0.b32.start [1/16] %v139, 128
    %221 = vxpose.xlu0.b32.cont [2/16] %v142, 128
    %222 = vxpose.xlu0.b32.cont [3/16] 0.0, 128
    %223 = vxpose.xlu0.b32.cont [4/16] 0.0, 128
    %224 = vxpose.xlu0.b32.cont [5/16] 0.0, 128
    %225 = vxpose.xlu0.b32.cont [6/16] 0.0, 128
    %226 = vxpose.xlu0.b32.cont [7/16] 0.0, 128
    %227 = vxpose.xlu0.b32.cont [8/16] 0.0, 128
    %228 = vxpose.xlu0.b32.cont [9/16] 0.0, 128
    %229 = vxpose.xlu0.b32.cont [10/16] 0.0, 128
    %230 = vxpose.xlu0.b32.cont [11/16] 0.0, 128
    %231 = vxpose.xlu0.b32.cont [12/16] 0.0, 128
    %232 = vxpose.xlu0.b32.cont [13/16] 0.0, 128
    %233 = vxpose.xlu0.b32.cont [14/16] 0.0, 128
    %234 = vxpose.xlu0.b32.cont [15/16] 0.0, 128
    %235 = vxpose.xlu0.b32.end [16/16] 0.0, 128
    %v236 = vpop.trf.xlu0
    %v237 = vpop.trf.xlu0
    %v238 = vpop.trf.xlu0
    %v239 = vpop.trf.xlu0
    %v240 = vpop.trf.xlu0
    %v241 = vpop.trf.xlu0
    %v242 = vpop.trf.xlu0
    %v243 = vpop.trf.xlu0
    %v244 = vpop.trf.xlu0
    %v245 = vpop.trf.xlu0
    %v246 = vpop.trf.xlu0
    %v247 = vpop.trf.xlu0
    %v248 = vpop.trf.xlu0
    %v249 = vpop.trf.xlu0
    %v250 = vpop.trf.xlu0
    %v251 = vpop.trf.xlu0
    %252 = vxpose.xlu0.b32.start [1/16] %v145, 128
    %253 = vxpose.xlu0.b32.cont [2/16] %v148, 128
    %254 = vxpose.xlu0.b32.cont [3/16] 0.0, 128
    %255 = vxpose.xlu0.b32.cont [4/16] 0.0, 128
    %256 = vxpose.xlu0.b32.cont [5/16] 0.0, 128
    %257 = vxpose.xlu0.b32.cont [6/16] 0.0, 128
    %258 = vxpose.xlu0.b32.cont [7/16] 0.0, 128
    %259 = vxpose.xlu0.b32.cont [8/16] 0.0, 128
    %260 = vxpose.xlu0.b32.cont [9/16] 0.0, 128
    %261 = vxpose.xlu0.b32.cont [10/16] 0.0, 128
    %262 = vxpose.xlu0.b32.cont [11/16] 0.0, 128
    %263 = vxpose.xlu0.b32.cont [12/16] 0.0, 128
    %264 = vxpose.xlu0.b32.cont [13/16] 0.0, 128
    %265 = vxpose.xlu0.b32.cont [14/16] 0.0, 128
    %266 = vxpose.xlu0.b32.cont [15/16] 0.0, 128
    %267 = vxpose.xlu0.b32.end [16/16] 0.0, 128
    %v268 = vpop.trf.xlu0
    %v269 = vpop.trf.xlu0
    %v270 = vpop.trf.xlu0
    %v271 = vpop.trf.xlu0
    %v272 = vpop.trf.xlu0
    %v273 = vpop.trf.xlu0
    %v274 = vpop.trf.xlu0
    %v275 = vpop.trf.xlu0
    %v276 = vpop.trf.xlu0
    %v277 = vpop.trf.xlu0
    %v278 = vpop.trf.xlu0
    %v279 = vpop.trf.xlu0
    %v280 = vpop.trf.xlu0
    %v281 = vpop.trf.xlu0
    %v282 = vpop.trf.xlu0
    %v283 = vpop.trf.xlu0
    %284 = vxpose.xlu0.b32.start [1/16] %v151, 128
    %285 = vxpose.xlu0.b32.cont [2/16] %v154, 128
    %286 = vxpose.xlu0.b32.cont [3/16] 0.0, 128
    %287 = vxpose.xlu0.b32.cont [4/16] 0.0, 128
    %288 = vxpose.xlu0.b32.cont [5/16] 0.0, 128
    %289 = vxpose.xlu0.b32.cont [6/16] 0.0, 128
    %290 = vxpose.xlu0.b32.cont [7/16] 0.0, 128
    %291 = vxpose.xlu0.b32.cont [8/16] 0.0, 128
    %292 = vxpose.xlu0.b32.cont [9/16] 0.0, 128
    %293 = vxpose.xlu0.b32.cont [10/16] 0.0, 128
    %294 = vxpose.xlu0.b32.cont [11/16] 0.0, 128
    %295 = vxpose.xlu0.b32.cont [12/16] 0.0, 128
    %296 = vxpose.xlu0.b32.cont [13/16] 0.0, 128
    %297 = vxpose.xlu0.b32.cont [14/16] 0.0, 128
    %298 = vxpose.xlu0.b32.cont [15/16] 0.0, 128
    %299 = vxpose.xlu0.b32.end [16/16] 0.0, 128
    %v300 = vpop.trf.xlu0
    %v301 = vpop.trf.xlu0
    %v302 = vpop.trf.xlu0
    %v303 = vpop.trf.xlu0
    %v304 = vpop.trf.xlu0
    %v305 = vpop.trf.xlu0
    %v306 = vpop.trf.xlu0
    %v307 = vpop.trf.xlu0
    %v308 = vpop.trf.xlu0
    %v309 = vpop.trf.xlu0
    %v310 = vpop.trf.xlu0
    %v311 = vpop.trf.xlu0
    %v312 = vpop.trf.xlu0
    %v313 = vpop.trf.xlu0
    %v314 = vpop.trf.xlu0
    %v315 = vpop.trf.xlu0
    %vm316 = vcmask 130048
    %v318 = vsel %vm316, %v172, 0
    %v321 = vsel %vm316, %v173, 0
    %v324 = vsel %vm316, %v174, 0
    %v327 = vsel %vm316, %v175, 0
    %v330 = vsel %vm316, %v176, 0
    %v333 = vsel %vm316, %v177, 0
    %v336 = vsel %vm316, %v178, 0
    %v339 = vsel %vm316, %v179, 0
    %v342 = vsel %vm316, %v180, 0
    %v345 = vsel %vm316, %v181, 0
    %v348 = vsel %vm316, %v182, 0
    %v351 = vsel %vm316, %v183, 0
    %v354 = vsel %vm316, %v184, 0
    %v357 = vsel %vm316, %v185, 0
    %v360 = vsel %vm316, %v186, 0
    %v363 = vsel %vm316, %v187, 0
    %v366 = vsel %vm316, %v204, 0
    %v369 = vsel %vm316, %v205, 0
    %v372 = vsel %vm316, %v206, 0
    %v375 = vsel %vm316, %v207, 0
    %v378 = vsel %vm316, %v208, 0
    %v381 = vsel %vm316, %v209, 0
    %v384 = vsel %vm316, %v210, 0
    %v387 = vsel %vm316, %v211, 0
    %v390 = vsel %vm316, %v212, 0
    %v393 = vsel %vm316, %v213, 0
    %v396 = vsel %vm316, %v214, 0
    %v399 = vsel %vm316, %v215, 0
    %v402 = vsel %vm316, %v216, 0
    %v405 = vsel %vm316, %v217, 0
    %v408 = vsel %vm316, %v218, 0
    %v411 = vsel %vm316, %v219, 0
    %v414 = vsel %vm316, %v236, 0
    %v417 = vsel %vm316, %v237, 0
    %v420 = vsel %vm316, %v238, 0
    %v423 = vsel %vm316, %v239, 0
    %v426 = vsel %vm316, %v240, 0
    %v429 = vsel %vm316, %v241, 0
    %v432 = vsel %vm316, %v242, 0
    %v435 = vsel %vm316, %v243, 0
    %v438 = vsel %vm316, %v244, 0
    %v441 = vsel %vm316, %v245, 0
    %v444 = vsel %vm316, %v246, 0
    %v447 = vsel %vm316, %v247, 0
    %v450 = vsel %vm316, %v248, 0
    %v453 = vsel %vm316, %v249, 0
    %v456 = vsel %vm316, %v250, 0
    %v459 = vsel %vm316, %v251, 0
    %v462 = vsel %vm316, %v268, 0
    %v465 = vsel %vm316, %v269, 0
    %v468 = vsel %vm316, %v270, 0
    %v471 = vsel %vm316, %v271, 0
    %v474 = vsel %vm316, %v272, 0
    %v477 = vsel %vm316, %v273, 0
    %v480 = vsel %vm316, %v274, 0
    %v483 = vsel %vm316, %v275, 0
    %v486 = vsel %vm316, %v276, 0
    %v489 = vsel %vm316, %v277, 0
    %v492 = vsel %vm316, %v278, 0
    %v495 = vsel %vm316, %v279, 0
    %v498 = vsel %vm316, %v280, 0
    %v501 = vsel %vm316, %v281, 0
    %v504 = vsel %vm316, %v282, 0
    %v507 = vsel %vm316, %v283, 0
    %v510 = vsel %vm316, %v300, 0
    %v513 = vsel %vm316, %v301, 0
    %v516 = vsel %vm316, %v302, 0
    %v519 = vsel %vm316, %v303, 0
    %v522 = vsel %vm316, %v304, 0
    %v525 = vsel %vm316, %v305, 0
    %v528 = vsel %vm316, %v306, 0
    %v531 = vsel %vm316, %v307, 0
    %v534 = vsel %vm316, %v308, 0
    %v537 = vsel %vm316, %v309, 0
    %v540 = vsel %vm316, %v310, 0
    %v543 = vsel %vm316, %v311, 0
    %v546 = vsel %vm316, %v312, 0
    %v549 = vsel %vm316, %v313, 0
    %v552 = vsel %vm316, %v314, 0
    %v555 = vsel %vm316, %v315, 0
    %557 = vmatpush.msra.mxu0 0.0
    %558 = vmatpush.msra.mxu0 0.0
    %559 = vmatpush.msra.mxu0 0.0
    %560 = vmatpush.msra.mxu0 0.0
    %561 = vmatpush.msra.mxu0 0.0
    %562 = vmatpush.msra.mxu0 0.0
    %563 = vmatpush.msra.mxu0 0.0
    %564 = vmatpush.msra.mxu0 0.0
    %565 = vmatpush.msra.mxu0 0.0
    %566 = vmatpush.msra.mxu0 0.0
    %567 = vmatpush.msra.mxu0 0.0
    %568 = vmatpush.msra.mxu0 0.0
    %569 = vmatpush.msra.mxu0 0.0
    %570 = vmatpush.msra.mxu0 0.0
    %571 = vmatpush.msra.mxu0 %v108
    %572 = vmatpush.msra.mxu0 %v107
    %573 = vmatmul.f32.gmra.mxu0 %v318
    %v574 = vpop.f32.mrf.mxu0
    %v575 = vadd.f32 0.0, %v574
    %576 = vmatmul.f32.gmra.mxu0 %v321
    %v577 = vpop.f32.mrf.mxu0
    %v578 = vadd.f32 0.0, %v577
    %579 = vmatmul.f32.gmra.mxu0 %v324
    %v580 = vpop.f32.mrf.mxu0
    %v581 = vadd.f32 0.0, %v580
    %582 = vmatmul.f32.gmra.mxu0 %v327
    %v583 = vpop.f32.mrf.mxu0
    %v584 = vadd.f32 0.0, %v583
    %585 = vmatmul.f32.gmra.mxu0 %v330
    %v586 = vpop.f32.mrf.mxu0
    %v587 = vadd.f32 0.0, %v586
    %588 = vmatmul.f32.gmra.mxu0 %v333
    %v589 = vpop.f32.mrf.mxu0
    %v590 = vadd.f32 0.0, %v589
    %591 = vmatmul.f32.gmra.mxu0 %v336
    %v592 = vpop.f32.mrf.mxu0
    %v593 = vadd.f32 0.0, %v592
    %594 = vmatmul.f32.gmra.mxu0 %v339
    %v595 = vpop.f32.mrf.mxu0
    %v596 = vadd.f32 0.0, %v595
    %597 = vmatmul.f32.gmra.mxu0 %v342
    %v598 = vpop.f32.mrf.mxu0
    %v599 = vadd.f32 0.0, %v598
    %600 = vmatmul.f32.gmra.mxu0 %v345
    %v601 = vpop.f32.mrf.mxu0
    %v602 = vadd.f32 0.0, %v601
    %603 = vmatmul.f32.gmra.mxu0 %v348
    %v604 = vpop.f32.mrf.mxu0
    %v605 = vadd.f32 0.0, %v604
    %606 = vmatmul.f32.gmra.mxu0 %v351
    %v607 = vpop.f32.mrf.mxu0
    %v608 = vadd.f32 0.0, %v607
    %609 = vmatmul.f32.gmra.mxu0 %v354
    %v610 = vpop.f32.mrf.mxu0
    %v611 = vadd.f32 0.0, %v610
    %612 = vmatmul.f32.gmra.mxu0 %v357
    %v613 = vpop.f32.mrf.mxu0
    %v614 = vadd.f32 0.0, %v613
    %615 = vmatmul.f32.gmra.mxu0 %v360
    %v616 = vpop.f32.mrf.mxu0
    %v617 = vadd.f32 0.0, %v616
    %618 = vmatmul.f32.gmra.mxu0 %v363
    %v619 = vpop.f32.mrf.mxu0
    %v620 = vadd.f32 0.0, %v619
    %621 = vmatmul.f32.gmra.mxu0 %v366
    %v622 = vpop.f32.mrf.mxu0
    %v623 = vadd.f32 0.0, %v622
    %624 = vmatmul.f32.gmra.mxu0 %v369
    %v625 = vpop.f32.mrf.mxu0
    %v626 = vadd.f32 0.0, %v625
    %627 = vmatmul.f32.gmra.mxu0 %v372
    %v628 = vpop.f32.mrf.mxu0
    %v629 = vadd.f32 0.0, %v628
    %630 = vmatmul.f32.gmra.mxu0 %v375
    %v631 = vpop.f32.mrf.mxu0
    %v632 = vadd.f32 0.0, %v631
    %633 = vmatmul.f32.gmra.mxu0 %v378
    %v634 = vpop.f32.mrf.mxu0
    %v635 = vadd.f32 0.0, %v634
    %636 = vmatmul.f32.gmra.mxu0 %v381
    %v637 = vpop.f32.mrf.mxu0
    %v638 = vadd.f32 0.0, %v637
    %639 = vmatmul.f32.gmra.mxu0 %v384
    %v640 = vpop.f32.mrf.mxu0
    %v641 = vadd.f32 0.0, %v640
    %642 = vmatmul.f32.gmra.mxu0 %v387
    %v643 = vpop.f32.mrf.mxu0
    %v644 = vadd.f32 0.0, %v643
    %645 = vmatmul.f32.gmra.mxu0 %v390
    %v646 = vpop.f32.mrf.mxu0
    %v647 = vadd.f32 0.0, %v646
    %648 = vmatmul.f32.gmra.mxu0 %v393
    %v649 = vpop.f32.mrf.mxu0
    %v650 = vadd.f32 0.0, %v649
    %651 = vmatmul.f32.gmra.mxu0 %v396
    %v652 = vpop.f32.mrf.mxu0
    %v653 = vadd.f32 0.0, %v652
    %654 = vmatmul.f32.gmra.mxu0 %v399
    %v655 = vpop.f32.mrf.mxu0
    %v656 = vadd.f32 0.0, %v655
    %657 = vmatmul.f32.gmra.mxu0 %v402
    %v658 = vpop.f32.mrf.mxu0
    %v659 = vadd.f32 0.0, %v658
    %660 = vmatmul.f32.gmra.mxu0 %v405
    %v661 = vpop.f32.mrf.mxu0
    %v662 = vadd.f32 0.0, %v661
    %663 = vmatmul.f32.gmra.mxu0 %v408
    %v664 = vpop.f32.mrf.mxu0
    %v665 = vadd.f32 0.0, %v664
    %666 = vmatmul.f32.gmra.mxu0 %v411
    %v667 = vpop.f32.mrf.mxu0
    %v668 = vadd.f32 0.0, %v667
    %669 = vmatmul.f32.gmra.mxu0 %v414
    %v670 = vpop.f32.mrf.mxu0
    %v671 = vadd.f32 0.0, %v670
    %672 = vmatmul.f32.gmra.mxu0 %v417
    %v673 = vpop.f32.mrf.mxu0
    %v674 = vadd.f32 0.0, %v673
    %675 = vmatmul.f32.gmra.mxu0 %v420
    %v676 = vpop.f32.mrf.mxu0
    %v677 = vadd.f32 0.0, %v676
    %678 = vmatmul.f32.gmra.mxu0 %v423
    %v679 = vpop.f32.mrf.mxu0
    %v680 = vadd.f32 0.0, %v679
    %681 = vmatmul.f32.gmra.mxu0 %v426
    %v682 = vpop.f32.mrf.mxu0
    %v683 = vadd.f32 0.0, %v682
    %684 = vmatmul.f32.gmra.mxu0 %v429
    %v685 = vpop.f32.mrf.mxu0
    %v686 = vadd.f32 0.0, %v685
    %687 = vmatmul.f32.gmra.mxu0 %v432
    %v688 = vpop.f32.mrf.mxu0
    %v689 = vadd.f32 0.0, %v688
    %690 = vmatmul.f32.gmra.mxu0 %v435
    %v691 = vpop.f32.mrf.mxu0
    %v692 = vadd.f32 0.0, %v691
    %693 = vmatmul.f32.gmra.mxu0 %v438
    %v694 = vpop.f32.mrf.mxu0
    %v695 = vadd.f32 0.0, %v694
    %696 = vmatmul.f32.gmra.mxu0 %v441
    %v697 = vpop.f32.mrf.mxu0
    %v698 = vadd.f32 0.0, %v697
    %699 = vmatmul.f32.gmra.mxu0 %v444
    %v700 = vpop.f32.mrf.mxu0
    %v701 = vadd.f32 0.0, %v700
    %702 = vmatmul.f32.gmra.mxu0 %v447
    %v703 = vpop.f32.mrf.mxu0
    %v704 = vadd.f32 0.0, %v703
    %705 = vmatmul.f32.gmra.mxu0 %v450
    %v706 = vpop.f32.mrf.mxu0
    %v707 = vadd.f32 0.0, %v706
    %708 = vmatmul.f32.gmra.mxu0 %v453
    %v709 = vpop.f32.mrf.mxu0
    %v710 = vadd.f32 0.0, %v709
    %711 = vmatmul.f32.gmra.mxu0 %v456
    %v712 = vpop.f32.mrf.mxu0
    %v713 = vadd.f32 0.0, %v712
    %714 = vmatmul.f32.gmra.mxu0 %v459
    %v715 = vpop.f32.mrf.mxu0
    %v716 = vadd.f32 0.0, %v715
    %717 = vmatmul.f32.gmra.mxu0 %v462
    %v718 = vpop.f32.mrf.mxu0
    %v719 = vadd.f32 0.0, %v718
    %720 = vmatmul.f32.gmra.mxu0 %v465
    %v721 = vpop.f32.mrf.mxu0
    %v722 = vadd.f32 0.0, %v721
    %723 = vmatmul.f32.gmra.mxu0 %v468
    %v724 = vpop.f32.mrf.mxu0
    %v725 = vadd.f32 0.0, %v724
    %726 = vmatmul.f32.gmra.mxu0 %v471
    %v727 = vpop.f32.mrf.mxu0
    %v728 = vadd.f32 0.0, %v727
    %729 = vmatmul.f32.gmra.mxu0 %v474
    %v730 = vpop.f32.mrf.mxu0
    %v731 = vadd.f32 0.0, %v730
    %732 = vmatmul.f32.gmra.mxu0 %v477
    %v733 = vpop.f32.mrf.mxu0
    %v734 = vadd.f32 0.0, %v733
    %735 = vmatmul.f32.gmra.mxu0 %v480
    %v736 = vpop.f32.mrf.mxu0
    %v737 = vadd.f32 0.0, %v736
    %738 = vmatmul.f32.gmra.mxu0 %v483
    %v739 = vpop.f32.mrf.mxu0
    %v740 = vadd.f32 0.0, %v739
    %741 = vmatmul.f32.gmra.mxu0 %v486
    %v742 = vpop.f32.mrf.mxu0
    %v743 = vadd.f32 0.0, %v742
    %744 = vmatmul.f32.gmra.mxu0 %v489
    %v745 = vpop.f32.mrf.mxu0
    %v746 = vadd.f32 0.0, %v745
    %747 = vmatmul.f32.gmra.mxu0 %v492
    %v748 = vpop.f32.mrf.mxu0
    %v749 = vadd.f32 0.0, %v748
    %750 = vmatmul.f32.gmra.mxu0 %v495
    %v751 = vpop.f32.mrf.mxu0
    %v752 = vadd.f32 0.0, %v751
    %753 = vmatmul.f32.gmra.mxu0 %v498
    %v754 = vpop.f32.mrf.mxu0
    %v755 = vadd.f32 0.0, %v754
    %756 = vmatmul.f32.gmra.mxu0 %v501
    %v757 = vpop.f32.mrf.mxu0
    %v758 = vadd.f32 0.0, %v757
    %759 = vmatmul.f32.gmra.mxu0 %v504
    %v760 = vpop.f32.mrf.mxu0
    %v761 = vadd.f32 0.0, %v760
    %762 = vmatmul.f32.gmra.mxu0 %v507
    %v763 = vpop.f32.mrf.mxu0
    %v764 = vadd.f32 0.0, %v763
    %765 = vmatmul.f32.gmra.mxu0 %v510
    %v766 = vpop.f32.mrf.mxu0
    %v767 = vadd.f32 0.0, %v766
    %768 = vmatmul.f32.gmra.mxu0 %v513
    %v769 = vpop.f32.mrf.mxu0
    %v770 = vadd.f32 0.0, %v769
    %771 = vmatmul.f32.gmra.mxu0 %v516
    %v772 = vpop.f32.mrf.mxu0
    %v773 = vadd.f32 0.0, %v772
    %774 = vmatmul.f32.gmra.mxu0 %v519
    %v775 = vpop.f32.mrf.mxu0
    %v776 = vadd.f32 0.0, %v775
    %777 = vmatmul.f32.gmra.mxu0 %v522
    %v778 = vpop.f32.mrf.mxu0
    %v779 = vadd.f32 0.0, %v778
    %780 = vmatmul.f32.gmra.mxu0 %v525
    %v781 = vpop.f32.mrf.mxu0
    %v782 = vadd.f32 0.0, %v781
    %783 = vmatmul.f32.gmra.mxu0 %v528
    %v784 = vpop.f32.mrf.mxu0
    %v785 = vadd.f32 0.0, %v784
    %786 = vmatmul.f32.gmra.mxu0 %v531
    %v787 = vpop.f32.mrf.mxu0
    %v788 = vadd.f32 0.0, %v787
    %789 = vmatmul.f32.gmra.mxu0 %v534
    %v790 = vpop.f32.mrf.mxu0
    %v791 = vadd.f32 0.0, %v790
    %792 = vmatmul.f32.gmra.mxu0 %v537
    %v793 = vpop.f32.mrf.mxu0
    %v794 = vadd.f32 0.0, %v793
    %795 = vmatmul.f32.gmra.mxu0 %v540
    %v796 = vpop.f32.mrf.mxu0
    %v797 = vadd.f32 0.0, %v796
    %798 = vmatmul.f32.gmra.mxu0 %v543
    %v799 = vpop.f32.mrf.mxu0
    %v800 = vadd.f32 0.0, %v799
    %801 = vmatmul.f32.gmra.mxu0 %v546
    %v802 = vpop.f32.mrf.mxu0
    %v803 = vadd.f32 0.0, %v802
    %804 = vmatmul.f32.gmra.mxu0 %v549
    %v805 = vpop.f32.mrf.mxu0
    %v806 = vadd.f32 0.0, %v805
    %807 = vmatmul.f32.gmra.mxu0 %v552
    %v808 = vpop.f32.mrf.mxu0
    %v809 = vadd.f32 0.0, %v808
    %810 = vmatmul.f32.gmra.mxu0 %v555
    %v811 = vpop.f32.mrf.mxu0
    %v812 = vadd.f32 0.0, %v811
    %813 = vdwg.mxu0
    %v814 = vmul.f32 %v575, %v623
    %v815 = vmul.f32 %v578, %v626
    %v816 = vmul.f32 %v581, %v629
    %v817 = vmul.f32 %v584, %v632
    %v818 = vmul.f32 %v587, %v635
    %v819 = vmul.f32 %v590, %v638
    %v820 = vmul.f32 %v593, %v641
    %v821 = vmul.f32 %v596, %v644
    %v822 = vmul.f32 %v599, %v647
    %v823 = vmul.f32 %v602, %v650
    %v824 = vmul.f32 %v605, %v653
    %v825 = vmul.f32 %v608, %v656
    %v826 = vmul.f32 %v611, %v659
    %v827 = vmul.f32 %v614, %v662
    %v828 = vmul.f32 %v617, %v665
    %v829 = vmul.f32 %v620, %v668
    %v830 = vsub.f32 %v767, %v814
    %v831 = vsub.f32 %v770, %v815
    %v832 = vsub.f32 %v773, %v816
    %v833 = vsub.f32 %v776, %v817
    %v834 = vsub.f32 %v779, %v818
    %v835 = vsub.f32 %v782, %v819
    %v836 = vsub.f32 %v785, %v820
    %v837 = vsub.f32 %v788, %v821
    %v838 = vsub.f32 %v791, %v822
    %v839 = vsub.f32 %v794, %v823
    %v840 = vsub.f32 %v797, %v824
    %v841 = vsub.f32 %v800, %v825
    %v842 = vsub.f32 %v803, %v826
    %v843 = vsub.f32 %v806, %v827
    %v844 = vsub.f32 %v809, %v828
    %v845 = vsub.f32 %v812, %v829
    %v846 = vmul.f32 %v830, 2.0
    %v847 = vmul.f32 %v831, 2.0
    %v848 = vmul.f32 %v832, 2.0
    %v849 = vmul.f32 %v833, 2.0
    %v850 = vmul.f32 %v834, 2.0
    %v851 = vmul.f32 %v835, 2.0
    %v852 = vmul.f32 %v836, 2.0
    %v853 = vmul.f32 %v837, 2.0
    %v854 = vmul.f32 %v838, 2.0
    %v855 = vmul.f32 %v839, 2.0
    %v856 = vmul.f32 %v840, 2.0
    %v857 = vmul.f32 %v841, 2.0
    %v858 = vmul.f32 %v842, 2.0
    %v859 = vmul.f32 %v843, 2.0
    %v860 = vmul.f32 %v844, 2.0
    %v861 = vmul.f32 %v845, 2.0
    %v862 = vadd.f32 %v846, 0.0009
    %v863 = vadd.f32 %v847, 0.0009
    %v864 = vadd.f32 %v848, 0.0009
    %v865 = vadd.f32 %v849, 0.0009
    %v866 = vadd.f32 %v850, 0.0009
    %v867 = vadd.f32 %v851, 0.0009
    %v868 = vadd.f32 %v852, 0.0009
    %v869 = vadd.f32 %v853, 0.0009
    %v870 = vadd.f32 %v854, 0.0009
    %v871 = vadd.f32 %v855, 0.0009
    %v872 = vadd.f32 %v856, 0.0009
    %v873 = vadd.f32 %v857, 0.0009
    %v874 = vadd.f32 %v858, 0.0009
    %v875 = vadd.f32 %v859, 0.0009
    %v876 = vadd.f32 %v860, 0.0009
    %v877 = vadd.f32 %v861, 0.0009
    %v878 = vmul.f32 %v575, %v575
    %v879 = vmul.f32 %v578, %v578
    %v880 = vmul.f32 %v581, %v581
    %v881 = vmul.f32 %v584, %v584
    %v882 = vmul.f32 %v587, %v587
    %v883 = vmul.f32 %v590, %v590
    %v884 = vmul.f32 %v593, %v593
    %v885 = vmul.f32 %v596, %v596
    %v886 = vmul.f32 %v599, %v599
    %v887 = vmul.f32 %v602, %v602
    %v888 = vmul.f32 %v605, %v605
    %v889 = vmul.f32 %v608, %v608
    %v890 = vmul.f32 %v611, %v611
    %v891 = vmul.f32 %v614, %v614
    %v892 = vmul.f32 %v617, %v617
    %v893 = vmul.f32 %v620, %v620
    %v894 = vmul.f32 %v623, %v623
    %v895 = vmul.f32 %v626, %v626
    %v896 = vmul.f32 %v629, %v629
    %v897 = vmul.f32 %v632, %v632
    %v898 = vmul.f32 %v635, %v635
    %v899 = vmul.f32 %v638, %v638
    %v900 = vmul.f32 %v641, %v641
    %v901 = vmul.f32 %v644, %v644
    %v902 = vmul.f32 %v647, %v647
    %v903 = vmul.f32 %v650, %v650
    %v904 = vmul.f32 %v653, %v653
    %v905 = vmul.f32 %v656, %v656
    %v906 = vmul.f32 %v659, %v659
    %v907 = vmul.f32 %v662, %v662
    %v908 = vmul.f32 %v665, %v665
    %v909 = vmul.f32 %v668, %v668
    %v910 = vsub.f32 %v671, %v878
    %v911 = vsub.f32 %v674, %v879
    %v912 = vsub.f32 %v677, %v880
    %v913 = vsub.f32 %v680, %v881
    %v914 = vsub.f32 %v683, %v882
    %v915 = vsub.f32 %v686, %v883
    %v916 = vsub.f32 %v689, %v884
    %v917 = vsub.f32 %v692, %v885
    %v918 = vsub.f32 %v695, %v886
    %v919 = vsub.f32 %v698, %v887
    %v920 = vsub.f32 %v701, %v888
    %v921 = vsub.f32 %v704, %v889
    %v922 = vsub.f32 %v707, %v890
    %v923 = vsub.f32 %v710, %v891
    %v924 = vsub.f32 %v713, %v892
    %v925 = vsub.f32 %v716, %v893
    %v926 = vsub.f32 %v719, %v894
    %v927 = vsub.f32 %v722, %v895
    %v928 = vsub.f32 %v725, %v896
    %v929 = vsub.f32 %v728, %v897
    %v930 = vsub.f32 %v731, %v898
    %v931 = vsub.f32 %v734, %v899
    %v932 = vsub.f32 %v737, %v900
    %v933 = vsub.f32 %v740, %v901
    %v934 = vsub.f32 %v743, %v902
    %v935 = vsub.f32 %v746, %v903
    %v936 = vsub.f32 %v749, %v904
    %v937 = vsub.f32 %v752, %v905
    %v938 = vsub.f32 %v755, %v906
    %v939 = vsub.f32 %v758, %v907
    %v940 = vsub.f32 %v761, %v908
    %v941 = vsub.f32 %v764, %v909
    %v942 = vadd.f32 %v910, %v926
    %v943 = vadd.f32 %v911, %v927
    %v944 = vadd.f32 %v912, %v928
    %v945 = vadd.f32 %v913, %v929
    %v946 = vadd.f32 %v914, %v930
    %v947 = vadd.f32 %v915, %v931
    %v948 = vadd.f32 %v916, %v932
    %v949 = vadd.f32 %v917, %v933
    %v950 = vadd.f32 %v918, %v934
    %v951 = vadd.f32 %v919, %v935
    %v952 = vadd.f32 %v920, %v936
    %v953 = vadd.f32 %v921, %v937
    %v954 = vadd.f32 %v922, %v938
    %v955 = vadd.f32 %v923, %v939
    %v956 = vadd.f32 %v924, %v940
    %v957 = vadd.f32 %v925, %v941
    %v958 = vadd.f32 %v942, 0.0009
    %v959 = vadd.f32 %v943, 0.0009
    %v960 = vadd.f32 %v944, 0.0009
    %v961 = vadd.f32 %v945, 0.0009
    %v962 = vadd.f32 %v946, 0.0009
    %v963 = vadd.f32 %v947, 0.0009
    %v964 = vadd.f32 %v948, 0.0009
    %v965 = vadd.f32 %v949, 0.0009
    %v966 = vadd.f32 %v950, 0.0009
    %v967 = vadd.f32 %v951, 0.0009
    %v968 = vadd.f32 %v952, 0.0009
    %v969 = vadd.f32 %v953, 0.0009
    %v970 = vadd.f32 %v954, 0.0009
    %v971 = vadd.f32 %v955, 0.0009
    %v972 = vadd.f32 %v956, 0.0009
    %v973 = vadd.f32 %v957, 0.0009
    %v974 = vmul.f32 %v814, 2.0
    %v975 = vmul.f32 %v815, 2.0
    %v976 = vmul.f32 %v816, 2.0
    %v977 = vmul.f32 %v817, 2.0
    %v978 = vmul.f32 %v818, 2.0
    %v979 = vmul.f32 %v819, 2.0
    %v980 = vmul.f32 %v820, 2.0
    %v981 = vmul.f32 %v821, 2.0
    %v982 = vmul.f32 %v822, 2.0
    %v983 = vmul.f32 %v823, 2.0
    %v984 = vmul.f32 %v824, 2.0
    %v985 = vmul.f32 %v825, 2.0
    %v986 = vmul.f32 %v826, 2.0
    %v987 = vmul.f32 %v827, 2.0
    %v988 = vmul.f32 %v828, 2.0
    %v989 = vmul.f32 %v829, 2.0
    %v990 = vadd.f32 %v974, 0.0001
    %v991 = vadd.f32 %v975, 0.0001
    %v992 = vadd.f32 %v976, 0.0001
    %v993 = vadd.f32 %v977, 0.0001
    %v994 = vadd.f32 %v978, 0.0001
    %v995 = vadd.f32 %v979, 0.0001
    %v996 = vadd.f32 %v980, 0.0001
    %v997 = vadd.f32 %v981, 0.0001
    %v998 = vadd.f32 %v982, 0.0001
    %v999 = vadd.f32 %v983, 0.0001
    %v1000 = vadd.f32 %v984, 0.0001
    %v1001 = vadd.f32 %v985, 0.0001
    %v1002 = vadd.f32 %v986, 0.0001
    %v1003 = vadd.f32 %v987, 0.0001
    %v1004 = vadd.f32 %v988, 0.0001
    %v1005 = vadd.f32 %v989, 0.0001
    %v1006 = vmul.f32 %v990, %v862
    %v1007 = vmul.f32 %v991, %v863
    %v1008 = vmul.f32 %v992, %v864
    %v1009 = vmul.f32 %v993, %v865
    %v1010 = vmul.f32 %v994, %v866
    %v1011 = vmul.f32 %v995, %v867
    %v1012 = vmul.f32 %v996, %v868
    %v1013 = vmul.f32 %v997, %v869
    %v1014 = vmul.f32 %v998, %v870
    %v1015 = vmul.f32 %v999, %v871
    %v1016 = vmul.f32 %v1000, %v872
    %v1017 = vmul.f32 %v1001, %v873
    %v1018 = vmul.f32 %v1002, %v874
    %v1019 = vmul.f32 %v1003, %v875
    %v1020 = vmul.f32 %v1004, %v876
    %v1021 = vmul.f32 %v1005, %v877
    %v1022 = vadd.f32 %v878, %v894
    %v1023 = vadd.f32 %v879, %v895
    %v1024 = vadd.f32 %v880, %v896
    %v1025 = vadd.f32 %v881, %v897
    %v1026 = vadd.f32 %v882, %v898
    %v1027 = vadd.f32 %v883, %v899
    %v1028 = vadd.f32 %v884, %v900
    %v1029 = vadd.f32 %v885, %v901
    %v1030 = vadd.f32 %v886, %v902
    %v1031 = vadd.f32 %v887, %v903
    %v1032 = vadd.f32 %v888, %v904
    %v1033 = vadd.f32 %v889, %v905
    %v1034 = vadd.f32 %v890, %v906
    %v1035 = vadd.f32 %v891, %v907
    %v1036 = vadd.f32 %v892, %v908
    %v1037 = vadd.f32 %v893, %v909
    %v1038 = vadd.f32 %v1022, 0.0001
    %v1039 = vadd.f32 %v1023, 0.0001
    %v1040 = vadd.f32 %v1024, 0.0001
    %v1041 = vadd.f32 %v1025, 0.0001
    %v1042 = vadd.f32 %v1026, 0.0001
    %v1043 = vadd.f32 %v1027, 0.0001
    %v1044 = vadd.f32 %v1028, 0.0001
    %v1045 = vadd.f32 %v1029, 0.0001
    %v1046 = vadd.f32 %v1030, 0.0001
    %v1047 = vadd.f32 %v1031, 0.0001
    %v1048 = vadd.f32 %v1032, 0.0001
    %v1049 = vadd.f32 %v1033, 0.0001
    %v1050 = vadd.f32 %v1034, 0.0001
    %v1051 = vadd.f32 %v1035, 0.0001
    %v1052 = vadd.f32 %v1036, 0.0001
    %v1053 = vadd.f32 %v1037, 0.0001
    %v1054 = vmul.f32 %v1038, %v958
    %v1055 = vmul.f32 %v1039, %v959
    %v1056 = vmul.f32 %v1040, %v960
    %v1057 = vmul.f32 %v1041, %v961
    %v1058 = vmul.f32 %v1042, %v962
    %v1059 = vmul.f32 %v1043, %v963
    %v1060 = vmul.f32 %v1044, %v964
    %v1061 = vmul.f32 %v1045, %v965
    %v1062 = vmul.f32 %v1046, %v966
    %v1063 = vmul.f32 %v1047, %v967
    %v1064 = vmul.f32 %v1048, %v968
    %v1065 = vmul.f32 %v1049, %v969
    %v1066 = vmul.f32 %v1050, %v970
    %v1067 = vmul.f32 %v1051, %v971
    %v1068 = vmul.f32 %v1052, %v972
    %v1069 = vmul.f32 %v1053, %v973
    %v1070 = vadd.f32 %v1054, 1e-12
    %v1071 = vadd.f32 %v1055, 1e-12
    %v1072 = vadd.f32 %v1056, 1e-12
    %v1073 = vadd.f32 %v1057, 1e-12
    %v1074 = vadd.f32 %v1058, 1e-12
    %v1075 = vadd.f32 %v1059, 1e-12
    %v1076 = vadd.f32 %v1060, 1e-12
    %v1077 = vadd.f32 %v1061, 1e-12
    %v1078 = vadd.f32 %v1062, 1e-12
    %v1079 = vadd.f32 %v1063, 1e-12
    %v1080 = vadd.f32 %v1064, 1e-12
    %v1081 = vadd.f32 %v1065, 1e-12
    %v1082 = vadd.f32 %v1066, 1e-12
    %v1083 = vadd.f32 %v1067, 1e-12
    %v1084 = vadd.f32 %v1068, 1e-12
    %v1085 = vadd.f32 %v1069, 1e-12
    %v1086 = vrcp.pop %v1070
    %v1087 = vmul.f32 %v1070, %v1086
    %v1088 = vsub.f32 1.0, %v1087
    %v1089 = vmul.f32 %v1086, %v1088
    %v1090 = vadd.f32 %v1086, %v1089
    %vm1091 = vweird.f32 %v1070
    %vm1092 = vweird.f32 %v1086
    %vm1093 = vmor %vm1091, %vm1092
    %v1094 = vsel %vm1093, %v1086, %v1090
    %v1095 = vand.u32 2147483647, %v1070
    %vm1096 = vcmp.eq.f32.partialorder %v1095, 8.507059e+37
    %v1097 = vand.u32 %v1070, 2147483648
    %v1098 = vor.u32 1.1754944e-38, %v1097
    %v1099 = vsel %vm1096, %v1098, %v1094
    %v1100 = vmul.f32 %v1006, %v1099
    %v1101 = vrcp.pop %v1071
    %v1102 = vmul.f32 %v1071, %v1101
    %v1103 = vsub.f32 1.0, %v1102
    %v1104 = vmul.f32 %v1101, %v1103
    %v1105 = vadd.f32 %v1101, %v1104
    %vm1106 = vweird.f32 %v1071
    %vm1107 = vweird.f32 %v1101
    %vm1108 = vmor %vm1106, %vm1107
    %v1109 = vsel %vm1108, %v1101, %v1105
    %v1110 = vand.u32 2147483647, %v1071
    %vm1111 = vcmp.eq.f32.partialorder %v1110, 8.507059e+37
    %v1112 = vand.u32 %v1071, 2147483648
    %v1113 = vor.u32 1.1754944e-38, %v1112
    %v1114 = vsel %vm1111, %v1113, %v1109
    %v1115 = vmul.f32 %v1007, %v1114
    %v1116 = vrcp.pop %v1072
    %v1117 = vmul.f32 %v1072, %v1116
    %v1118 = vsub.f32 1.0, %v1117
    %v1119 = vmul.f32 %v1116, %v1118
    %v1120 = vadd.f32 %v1116, %v1119
    %vm1121 = vweird.f32 %v1072
    %vm1122 = vweird.f32 %v1116
    %vm1123 = vmor %vm1121, %vm1122
    %v1124 = vsel %vm1123, %v1116, %v1120
    %v1125 = vand.u32 2147483647, %v1072
    %vm1126 = vcmp.eq.f32.partialorder %v1125, 8.507059e+37
    %v1127 = vand.u32 %v1072, 2147483648
    %v1128 = vor.u32 1.1754944e-38, %v1127
    %v1129 = vsel %vm1126, %v1128, %v1124
    %v1130 = vmul.f32 %v1008, %v1129
    %v1131 = vrcp.pop %v1073
    %v1132 = vmul.f32 %v1073, %v1131
    %v1133 = vsub.f32 1.0, %v1132
    %v1134 = vmul.f32 %v1131, %v1133
    %v1135 = vadd.f32 %v1131, %v1134
    %vm1136 = vweird.f32 %v1073
    %vm1137 = vweird.f32 %v1131
    %vm1138 = vmor %vm1136, %vm1137
    %v1139 = vsel %vm1138, %v1131, %v1135
    %v1140 = vand.u32 2147483647, %v1073
    %vm1141 = vcmp.eq.f32.partialorder %v1140, 8.507059e+37
    %v1142 = vand.u32 %v1073, 2147483648
    %v1143 = vor.u32 1.1754944e-38, %v1142
    %v1144 = vsel %vm1141, %v1143, %v1139
    %v1145 = vmul.f32 %v1009, %v1144
    %v1146 = vrcp.pop %v1074
    %v1147 = vmul.f32 %v1074, %v1146
    %v1148 = vsub.f32 1.0, %v1147
    %v1149 = vmul.f32 %v1146, %v1148
    %v1150 = vadd.f32 %v1146, %v1149
    %vm1151 = vweird.f32 %v1074
    %vm1152 = vweird.f32 %v1146
    %vm1153 = vmor %vm1151, %vm1152
    %v1154 = vsel %vm1153, %v1146, %v1150
    %v1155 = vand.u32 2147483647, %v1074
    %vm1156 = vcmp.eq.f32.partialorder %v1155, 8.507059e+37
    %v1157 = vand.u32 %v1074, 2147483648
    %v1158 = vor.u32 1.1754944e-38, %v1157
    %v1159 = vsel %vm1156, %v1158, %v1154
    %v1160 = vmul.f32 %v1010, %v1159
    %v1161 = vrcp.pop %v1075
    %v1162 = vmul.f32 %v1075, %v1161
    %v1163 = vsub.f32 1.0, %v1162
    %v1164 = vmul.f32 %v1161, %v1163
    %v1165 = vadd.f32 %v1161, %v1164
    %vm1166 = vweird.f32 %v1075
    %vm1167 = vweird.f32 %v1161
    %vm1168 = vmor %vm1166, %vm1167
    %v1169 = vsel %vm1168, %v1161, %v1165
    %v1170 = vand.u32 2147483647, %v1075
    %vm1171 = vcmp.eq.f32.partialorder %v1170, 8.507059e+37
    %v1172 = vand.u32 %v1075, 2147483648
    %v1173 = vor.u32 1.1754944e-38, %v1172
    %v1174 = vsel %vm1171, %v1173, %v1169
    %v1175 = vmul.f32 %v1011, %v1174
    %v1176 = vrcp.pop %v1076
    %v1177 = vmul.f32 %v1076, %v1176
    %v1178 = vsub.f32 1.0, %v1177
    %v1179 = vmul.f32 %v1176, %v1178
    %v1180 = vadd.f32 %v1176, %v1179
    %vm1181 = vweird.f32 %v1076
    %vm1182 = vweird.f32 %v1176
    %vm1183 = vmor %vm1181, %vm1182
    %v1184 = vsel %vm1183, %v1176, %v1180
    %v1185 = vand.u32 2147483647, %v1076
    %vm1186 = vcmp.eq.f32.partialorder %v1185, 8.507059e+37
    %v1187 = vand.u32 %v1076, 2147483648
    %v1188 = vor.u32 1.1754944e-38, %v1187
    %v1189 = vsel %vm1186, %v1188, %v1184
    %v1190 = vmul.f32 %v1012, %v1189
    %v1191 = vrcp.pop %v1077
    %v1192 = vmul.f32 %v1077, %v1191
    %v1193 = vsub.f32 1.0, %v1192
    %v1194 = vmul.f32 %v1191, %v1193
    %v1195 = vadd.f32 %v1191, %v1194
    %vm1196 = vweird.f32 %v1077
    %vm1197 = vweird.f32 %v1191
    %vm1198 = vmor %vm1196, %vm1197
    %v1199 = vsel %vm1198, %v1191, %v1195
    %v1200 = vand.u32 2147483647, %v1077
    %vm1201 = vcmp.eq.f32.partialorder %v1200, 8.507059e+37
    %v1202 = vand.u32 %v1077, 2147483648
    %v1203 = vor.u32 1.1754944e-38, %v1202
    %v1204 = vsel %vm1201, %v1203, %v1199
    %v1205 = vmul.f32 %v1013, %v1204
    %v1206 = vrcp.pop %v1078
    %v1207 = vmul.f32 %v1078, %v1206
    %v1208 = vsub.f32 1.0, %v1207
    %v1209 = vmul.f32 %v1206, %v1208
    %v1210 = vadd.f32 %v1206, %v1209
    %vm1211 = vweird.f32 %v1078
    %vm1212 = vweird.f32 %v1206
    %vm1213 = vmor %vm1211, %vm1212
    %v1214 = vsel %vm1213, %v1206, %v1210
    %v1215 = vand.u32 2147483647, %v1078
    %vm1216 = vcmp.eq.f32.partialorder %v1215, 8.507059e+37
    %v1217 = vand.u32 %v1078, 2147483648
    %v1218 = vor.u32 1.1754944e-38, %v1217
    %v1219 = vsel %vm1216, %v1218, %v1214
    %v1220 = vmul.f32 %v1014, %v1219
    %v1221 = vrcp.pop %v1079
    %v1222 = vmul.f32 %v1079, %v1221
    %v1223 = vsub.f32 1.0, %v1222
    %v1224 = vmul.f32 %v1221, %v1223
    %v1225 = vadd.f32 %v1221, %v1224
    %vm1226 = vweird.f32 %v1079
    %vm1227 = vweird.f32 %v1221
    %vm1228 = vmor %vm1226, %vm1227
    %v1229 = vsel %vm1228, %v1221, %v1225
    %v1230 = vand.u32 2147483647, %v1079
    %vm1231 = vcmp.eq.f32.partialorder %v1230, 8.507059e+37
    %v1232 = vand.u32 %v1079, 2147483648
    %v1233 = vor.u32 1.1754944e-38, %v1232
    %v1234 = vsel %vm1231, %v1233, %v1229
    %v1235 = vmul.f32 %v1015, %v1234
    %v1236 = vrcp.pop %v1080
    %v1237 = vmul.f32 %v1080, %v1236
    %v1238 = vsub.f32 1.0, %v1237
    %v1239 = vmul.f32 %v1236, %v1238
    %v1240 = vadd.f32 %v1236, %v1239
    %vm1241 = vweird.f32 %v1080
    %vm1242 = vweird.f32 %v1236
    %vm1243 = vmor %vm1241, %vm1242
    %v1244 = vsel %vm1243, %v1236, %v1240
    %v1245 = vand.u32 2147483647, %v1080
    %vm1246 = vcmp.eq.f32.partialorder %v1245, 8.507059e+37
    %v1247 = vand.u32 %v1080, 2147483648
    %v1248 = vor.u32 1.1754944e-38, %v1247
    %v1249 = vsel %vm1246, %v1248, %v1244
    %v1250 = vmul.f32 %v1016, %v1249
    %v1251 = vrcp.pop %v1081
    %v1252 = vmul.f32 %v1081, %v1251
    %v1253 = vsub.f32 1.0, %v1252
    %v1254 = vmul.f32 %v1251, %v1253
    %v1255 = vadd.f32 %v1251, %v1254
    %vm1256 = vweird.f32 %v1081
    %vm1257 = vweird.f32 %v1251
    %vm1258 = vmor %vm1256, %vm1257
    %v1259 = vsel %vm1258, %v1251, %v1255
    %v1260 = vand.u32 2147483647, %v1081
    %vm1261 = vcmp.eq.f32.partialorder %v1260, 8.507059e+37
    %v1262 = vand.u32 %v1081, 2147483648
    %v1263 = vor.u32 1.1754944e-38, %v1262
    %v1264 = vsel %vm1261, %v1263, %v1259
    %v1265 = vmul.f32 %v1017, %v1264
    %v1266 = vrcp.pop %v1082
    %v1267 = vmul.f32 %v1082, %v1266
    %v1268 = vsub.f32 1.0, %v1267
    %v1269 = vmul.f32 %v1266, %v1268
    %v1270 = vadd.f32 %v1266, %v1269
    %vm1271 = vweird.f32 %v1082
    %vm1272 = vweird.f32 %v1266
    %vm1273 = vmor %vm1271, %vm1272
    %v1274 = vsel %vm1273, %v1266, %v1270
    %v1275 = vand.u32 2147483647, %v1082
    %vm1276 = vcmp.eq.f32.partialorder %v1275, 8.507059e+37
    %v1277 = vand.u32 %v1082, 2147483648
    %v1278 = vor.u32 1.1754944e-38, %v1277
    %v1279 = vsel %vm1276, %v1278, %v1274
    %v1280 = vmul.f32 %v1018, %v1279
    %v1281 = vrcp.pop %v1083
    %v1282 = vmul.f32 %v1083, %v1281
    %v1283 = vsub.f32 1.0, %v1282
    %v1284 = vmul.f32 %v1281, %v1283
    %v1285 = vadd.f32 %v1281, %v1284
    %vm1286 = vweird.f32 %v1083
    %vm1287 = vweird.f32 %v1281
    %vm1288 = vmor %vm1286, %vm1287
    %v1289 = vsel %vm1288, %v1281, %v1285
    %v1290 = vand.u32 2147483647, %v1083
    %vm1291 = vcmp.eq.f32.partialorder %v1290, 8.507059e+37
    %v1292 = vand.u32 %v1083, 2147483648
    %v1293 = vor.u32 1.1754944e-38, %v1292
    %v1294 = vsel %vm1291, %v1293, %v1289
    %v1295 = vmul.f32 %v1019, %v1294
    %v1296 = vrcp.pop %v1084
    %v1297 = vmul.f32 %v1084, %v1296
    %v1298 = vsub.f32 1.0, %v1297
    %v1299 = vmul.f32 %v1296, %v1298
    %v1300 = vadd.f32 %v1296, %v1299
    %vm1301 = vweird.f32 %v1084
    %vm1302 = vweird.f32 %v1296
    %vm1303 = vmor %vm1301, %vm1302
    %v1304 = vsel %vm1303, %v1296, %v1300
    %v1305 = vand.u32 2147483647, %v1084
    %vm1306 = vcmp.eq.f32.partialorder %v1305, 8.507059e+37
    %v1307 = vand.u32 %v1084, 2147483648
    %v1308 = vor.u32 1.1754944e-38, %v1307
    %v1309 = vsel %vm1306, %v1308, %v1304
    %v1310 = vmul.f32 %v1020, %v1309
    %v1311 = vrcp.pop %v1085
    %v1312 = vmul.f32 %v1085, %v1311
    %v1313 = vsub.f32 1.0, %v1312
    %v1314 = vmul.f32 %v1311, %v1313
    %v1315 = vadd.f32 %v1311, %v1314
    %vm1316 = vweird.f32 %v1085
    %vm1317 = vweird.f32 %v1311
    %vm1318 = vmor %vm1316, %vm1317
    %v1319 = vsel %vm1318, %v1311, %v1315
    %v1320 = vand.u32 2147483647, %v1085
    %vm1321 = vcmp.eq.f32.partialorder %v1320, 8.507059e+37
    %v1322 = vand.u32 %v1085, 2147483648
    %v1323 = vor.u32 1.1754944e-38, %v1322
    %v1324 = vsel %vm1321, %v1323, %v1319
    %v1325 = vmul.f32 %v1021, %v1324
    %v1326 = vsub.f32 1.0, %v1100
    %v1327 = vsub.f32 1.0, %v1115
    %v1328 = vsub.f32 1.0, %v1130
    %v1329 = vsub.f32 1.0, %v1145
    %v1330 = vsub.f32 1.0, %v1160
    %v1331 = vsub.f32 1.0, %v1175
    %v1332 = vsub.f32 1.0, %v1190
    %v1333 = vsub.f32 1.0, %v1205
    %v1334 = vsub.f32 1.0, %v1220
    %v1335 = vsub.f32 1.0, %v1235
    %v1336 = vsub.f32 1.0, %v1250
    %v1337 = vsub.f32 1.0, %v1265
    %v1338 = vsub.f32 1.0, %v1280
    %v1339 = vsub.f32 1.0, %v1295
    %v1340 = vsub.f32 1.0, %v1310
    %v1341 = vsub.f32 1.0, %v1325
    %v1342 = vsel %vm316, %v1326, 0.0
    %v1343 = vsel %vm316, %v1327, 0.0
    %v1344 = vadd.f32 %v1342, %v1343
    %v1345 = vsel %vm316, %v1328, 0.0
    %v1346 = vadd.f32 %v1344, %v1345
    %v1347 = vsel %vm316, %v1329, 0.0
    %v1348 = vadd.f32 %v1346, %v1347
    %v1349 = vsel %vm316, %v1330, 0.0
    %v1350 = vadd.f32 %v1348, %v1349
    %v1351 = vsel %vm316, %v1331, 0.0
    %v1352 = vadd.f32 %v1350, %v1351
    %v1353 = vsel %vm316, %v1332, 0.0
    %v1354 = vadd.f32 %v1352, %v1353
    %v1355 = vsel %vm316, %v1333, 0.0
    %v1356 = vadd.f32 %v1354, %v1355
    %v1357 = vsel %vm316, %v1334, 0.0
    %v1358 = vadd.f32 %v1356, %v1357
    %v1359 = vsel %vm316, %v1335, 0.0
    %v1360 = vadd.f32 %v1358, %v1359
    %v1361 = vsel %vm316, %v1336, 0.0
    %v1362 = vadd.f32 %v1360, %v1361
    %v1363 = vsel %vm316, %v1337, 0.0
    %v1364 = vadd.f32 %v1362, %v1363
    %v1365 = vsel %vm316, %v1338, 0.0
    %v1366 = vadd.f32 %v1364, %v1365
    %v1367 = vsel %vm316, %v1339, 0.0
    %v1368 = vadd.f32 %v1366, %v1367
    %v1369 = vsel %vm316, %v1340, 0.0
    %v1370 = vadd.f32 %v1368, %v1369
    %v1371 = vsel %vm316, %v1341, 0.0
    %v1372 = vadd.f32 %v1370, %v1371
    %v1373 = vrot.slane %v1372, 4
    %v1374 = vadd.f32 %v1372, %v1373
    %v1375 = vrot.slane %v1374, 2
    %v1376 = vadd.f32 %v1374, %v1375
    %v1377 = vrot.slane %v1376, 1
    %v1378 = vadd.f32 %v1376, %v1377
    %vm1379 = vcmask 122880
    %1380 = vst.msk [vmem:[#allocation10] sm:$0x1] %vm1379, %v1378
    // Predicated region
    $region34: #{tpu_custom_call.1} parent=1 // pred_check
      _
    $region35: #{tpu_custom_call.1} parent=1 // pred_check_branch
      %1382 = sbr.rel (0) target = $region37
    $region36: #{tpu_custom_call.1} parent=1 // pred_region
      %1384 = vsyncadd [#allocation4], 0
      %s1386 = sshll.u32 [#allocation10], 4
      %s1387 = int_to_ptr.vmem [resolvable:$true] %s1386
      %s1388 = sshll.u32 %s4, 4
      %s1389 = int_to_ptr.hbm [resolvable:$true] %s1388
      %1391 = dma.vmem_to_hbm [thread:$0]  %s1387, 16, %s1389, [#allocation4]
    $region37: #{tpu_custom_call.1} parent=1 // pred_fallthru
      _
    // Predicated region
    $region38: #{tpu_custom_call.1} parent=1 // pred_check
      _
    $region39: #{tpu_custom_call.1} parent=1 // pred_check_branch
      %1393 = sbr.rel (0) target = $region41
    $region40: #{tpu_custom_call.1} parent=1 // pred_region
      %1395 = dma.done [#allocation4], 16
    $region41: #{tpu_custom_call.1} parent=1 // pred_fallthru
      _
    %1396 = vsyncpa [#allocation3], 1
    %1397 = vsyncpa [#allocation6], 1
    %1398 = vsyncpa [#allocation9], 1
    %1399 = vsyncpa [#allocation4], 1

</llo_original>
